<compile_context>
chip_gen: v7x
topology: tpu7x:2x2x1
jax: 0.10.0
libtpu: 0.0.40
codegen_flags: <defaults>
</compile_context>

<pallas_src>
import functools

import jax
import jax.numpy as jnp
from jax.experimental import pallas as pl
from jax.experimental.pallas import tpu as pltpu


def _round_up(x, m):
    return (x + m - 1) // m * m


def _embed_kernel(ids_ref, pos_ref, wte_hbm, wpe_ref, o_ref, tbuf, pbuf, sem, *, tq):
    """One grid step = TQ tokens: gather wte rows via DMA, wpe rows from VMEM, add."""
    base = pl.program_id(0) * tq

    # 1) Kick off all token-embedding row gathers (HBM -> VMEM scratch), one DMA per row,
    #    all sharing a single DMA semaphore.
    @pl.loop(0, tq)
    def _start(t):
        tok = ids_ref[base + t]
        pltpu.make_async_copy(
            wte_hbm.at[pl.ds(tok, 1)], tbuf.at[pl.ds(t, 1)], sem.at[0]
        ).start()

    # 2) Gather positional rows from the VMEM-resident wpe table while the DMAs fly.
    @pl.loop(0, tq)
    def _pos(t):
        p = pos_ref[base + t]
        pbuf[pl.ds(t, 1), :] = wpe_ref[pl.ds(p, 1), :]

    # 3) Wait for all token-row DMAs (same-shape waits drain the shared semaphore).
    @pl.loop(0, tq)
    def _wait(t):
        tok = ids_ref[base + t]
        pltpu.make_async_copy(
            wte_hbm.at[pl.ds(tok, 1)], tbuf.at[pl.ds(t, 1)], sem.at[0]
        ).wait()

    # 4) One dense (TQ, D) add + full-vreg store.
    o_ref[...] = tbuf[...] + pbuf[...]


def _gather_add(ids_flat, pos_flat, wte, wpe, *, tq=128):
    """out[t, :] = wte[ids_flat[t], :] + wpe[pos_flat[t], :]  (blocked over TQ tokens)."""
    n_tok = ids_flat.shape[0]
    vocab, d = wte.shape
    max_pos = wpe.shape[0]

    # Block size: multiple of 8 sublanes, capped at 128 tokens per step.
    tq = min(tq, _round_up(n_tok, 8))
    n_pad = _round_up(n_tok, tq)
    if n_pad != n_tok:
        pad = n_pad - n_tok
        ids_flat = jnp.concatenate([ids_flat, jnp.zeros((pad,), jnp.int32)])
        pos_flat = jnp.concatenate([pos_flat, jnp.zeros((pad,), jnp.int32)])
    n_blocks = n_pad // tq

    kernel = functools.partial(_embed_kernel, tq=tq)

    grid_spec = pltpu.PrefetchScalarGridSpec(
        num_scalar_prefetch=2,
        grid=(n_blocks,),
        in_specs=[
            # wte stays in HBM; rows are gathered manually via make_async_copy.
            pl.BlockSpec(memory_space=pl.ANY),
            # wpe fully resident in VMEM (same block every step -> no re-fetch).
            pl.BlockSpec((max_pos, d), lambda b, ids, pos: (0, 0)),
        ],
        out_specs=pl.BlockSpec((tq, d), lambda b, ids, pos: (b, 0)),
        scratch_shapes=[
            pltpu.VMEM((tq, d), wte.dtype),      # gathered token rows
            pltpu.VMEM((tq, d), wte.dtype),      # gathered positional rows
            pltpu.SemaphoreType.DMA((1,)),       # shared DMA semaphore
        ],
    )

    out = pl.pallas_call(
        kernel,
        out_shape=jax.ShapeDtypeStruct((n_pad, d), wte.dtype),
        grid_spec=grid_spec,
        compiler_params=pltpu.CompilerParams(
            dimension_semantics=("parallel",),   # token blocks are independent (v7x 2-TC)
            vmem_limit_bytes=64 * 1024 * 1024,
        ),
    )(ids_flat, pos_flat, wte, wpe)
    return out[:n_tok]


def gpt_embeddings_forward(params, input_ids, past_layer=None, mask=None):
    """Faithful port of GPTEmbeddings.forward (token emb + positional emb)."""
    wte = params["wte"]
    wpe = params["wpe"]
    vocab, d = wte.shape
    max_pos = wpe.shape[0]

    input_ids = jnp.asarray(input_ids, jnp.int32)
    s = input_ids.shape[-1]
    input_ids = input_ids.reshape(-1, s)
    b = input_ids.shape[0]

    if mask is None:
        past_length = past_layer[0].shape[2] if past_layer is not None else 0
        past_length = jnp.full((b, 1), past_length, jnp.int32)
    else:
        past_length = (jnp.asarray(mask, jnp.int32) - 1).sum(-1, keepdims=True)
        if past_layer is not None:
            past_length = past_length + jnp.int32(past_layer[0].shape[2])

    position_ids = jnp.arange(s, dtype=jnp.int32)[None, :] + past_length
    position_ids = jnp.where(position_ids < 0, 0, position_ids)   # spec: clamp below at 0
    position_ids = jnp.broadcast_to(position_ids, (b, s))

    # Clamp so the data-dependent DMA / VMEM gathers can never go out of bounds.
    ids_flat = jnp.clip(input_ids.reshape(-1), 0, vocab - 1)
    pos_flat = jnp.clip(position_ids.reshape(-1), 0, max_pos - 1)

    out_flat = _gather_add(ids_flat, pos_flat, wte, wpe)
    return out_flat.reshape(b, s, d)


def init_params(key, vocab_size, max_position_embeddings, hidden_size):
    k1, k2 = jax.random.split(key)
    wte = 0.02 * jax.random.normal(k1, (vocab_size, hidden_size), jnp.float32)
    wpe = 0.02 * jax.random.normal(k2, (max_position_embeddings, hidden_size),
                                   jnp.float32)
    return {"wte": wte, "wpe": wpe}


if __name__ == "__main__":
    VOCAB = 256
    MAX_POS = 64
    HIDDEN = 128
    BATCH = 2
    SEQ = 16

    key = jax.random.PRNGKey(0)
    k_params, k_ids = jax.random.split(key)

    params = init_params(k_params, VOCAB, MAX_POS, HIDDEN)
    input_ids = jax.random.randint(k_ids, (BATCH, SEQ), 0, VOCAB, jnp.int32)

    # --- no-mask path -------------------------------------------------------
    fwd = jax.jit(lambda ids: gpt_embeddings_forward(params, ids))
    out = fwd(input_ids)
    jax.block_until_ready(out)

    pos_ref = jnp.broadcast_to(jnp.arange(SEQ, dtype=jnp.int32)[None, :], (BATCH, SEQ))
    ref = params["wte"][input_ids] + params["wpe"][pos_ref]
    assert out.shape == (BATCH, SEQ, HIDDEN)
    assert jnp.allclose(out, ref, atol=1e-6), "mismatch vs reference (no mask)"

    # --- mask path (same formula as the torch module) -----------------------
    mask = jnp.ones((BATCH, SEQ), jnp.int32)
    mask = mask.at[0, :3].set(0)   # three padded tokens in row 0
    fwd_mask = jax.jit(lambda ids, m: gpt_embeddings_forward(params, ids, mask=m))
    out_m = fwd_mask(input_ids, mask)
    jax.block_until_ready(out_m)

    past_len = (mask - 1).sum(-1, keepdims=True)
    pos_m = jnp.arange(SEQ, dtype=jnp.int32)[None, :] + past_len
    pos_m = jnp.where(pos_m < 0, 0, pos_m)
    ref_m = params["wte"][input_ids] + params["wpe"][pos_m]
    assert jnp.allclose(out_m, ref_m, atol=1e-6), "mismatch vs reference (mask)"

    print("KERNEL_OK")
</pallas_src>

<mosaic_0001>
module attributes {stable_mosaic.version = 11 : i64} {
  func.func @_embed_kernel(%arg0: i32, %arg1: memref<32xi32, #tpu.memory_space<smem>>, %arg2: memref<32xi32, #tpu.memory_space<smem>>, %arg3: memref<256x128xf32, #tpu.memory_space<any>>, %arg4: memref<64x128xf32, #tpu.memory_space<vmem>>, %arg5: memref<32x128xf32, #tpu.memory_space<vmem>>, %arg6: memref<32x128xf32, #tpu.memory_space<vmem>>, %arg7: memref<32x128xf32, #tpu.memory_space<vmem>>, %arg8: memref<1x!tpu.dma_semaphore, #tpu.memory_space<semaphore_mem>>) attributes {dimension_semantics = [#tpu.dimension_semantics<parallel>], iteration_bounds = array<i64: 1>, scalar_prefetch = 2 : i64, scratch_operands = 3 : i64, tpu.core_type = #tpu.core_type<tc>, window_params = [{}, {pipeline_mode = #tpu.pipeline_mode<synchronous>, transform_indices = @transform_1, window_bounds = array<i64: 64, 128>}, {transform_indices = @transform_2, window_bounds = array<i64: 32, 128>}]} {
    %c32_i32 = arith.constant 32 : i32
    %0 = arith.muli %arg0, %c32_i32 : i32
    %c0_i32 = arith.constant 0 : i32
    %c32_i32_0 = arith.constant 32 : i32
    %1 = arith.addi %c0_i32, %c32_i32_0 : i32
    %c1_i32 = arith.constant 1 : i32
    scf.for %arg9 = %c0_i32 to %1 step %c1_i32  : i32 {
      %c1_i32_15 = arith.constant 1 : i32
      %8 = arith.muli %arg9, %c1_i32_15 : i32
      %c0_i32_16 = arith.constant 0 : i32
      %9 = arith.addi %c0_i32_16, %8 : i32
      %10 = arith.addi %0, %9 : i32
      %11 = arith.index_cast %10 : i32 to index
      %12 = memref.load %arg1[%11] : memref<32xi32, #tpu.memory_space<smem>>
      %c0_i32_17 = arith.constant 0 : i32
      %c0_i32_18 = arith.constant 0 : i32
      %13 = tpu.memref_slice %arg3[%12, %c0_i32_18] : memref<256x128xf32, #tpu.memory_space<any>> -> memref<1x128xf32, #tpu.memory_space<any>>
      %c0_i32_19 = arith.constant 0 : i32
      %14 = tpu.memref_slice %arg6[%9, %c0_i32_19] : memref<32x128xf32, #tpu.memory_space<vmem>> -> memref<1x128xf32, #tpu.memory_space<vmem>>
      %15 = tpu.memref_slice %arg8[%c0_i32_17] : memref<1x!tpu.dma_semaphore, #tpu.memory_space<semaphore_mem>> -> memref<1x!tpu.dma_semaphore, #tpu.memory_space<semaphore_mem>>
      %16 = tpu.memref_squeeze %15 : memref<1x!tpu.dma_semaphore, #tpu.memory_space<semaphore_mem>> -> memref<!tpu.dma_semaphore, #tpu.memory_space<semaphore_mem>>
      tpu.enqueue_dma source(%13 : memref<1x128xf32, #tpu.memory_space<any>>) target(%14 : memref<1x128xf32, #tpu.memory_space<vmem>>) target_semaphore(%16 : memref<!tpu.dma_semaphore, #tpu.memory_space<semaphore_mem>>)
    }
    %c32_i32_1 = arith.constant 32 : i32
    %c0_i32_2 = arith.constant 0 : i32
    %c32_i32_3 = arith.constant 32 : i32
    %2 = arith.addi %c0_i32_2, %c32_i32_3 : i32
    %c1_i32_4 = arith.constant 1 : i32
    scf.for %arg9 = %c0_i32_2 to %2 step %c1_i32_4  : i32 {
      %c1_i32_15 = arith.constant 1 : i32
      %8 = arith.muli %arg9, %c1_i32_15 : i32
      %c0_i32_16 = arith.constant 0 : i32
      %9 = arith.addi %c0_i32_16, %8 : i32
      %10 = arith.addi %0, %9 : i32
      %11 = arith.index_cast %10 : i32 to index
      %12 = memref.load %arg2[%11] : memref<32xi32, #tpu.memory_space<smem>>
      %13 = arith.index_cast %12 : i32 to index
      %c0_17 = arith.constant 0 : index
      %14 = vector.load %arg4[%13, %c0_17] : memref<64x128xf32, #tpu.memory_space<vmem>>, vector<1x128xf32>
      %15 = arith.index_cast %9 : i32 to index
      %c0_18 = arith.constant 0 : index
      %16 = vector.load %arg7[%15, %c0_18] : memref<32x128xf32, #tpu.memory_space<vmem>>, vector<1x128xf32>
      tpu.vector_store %arg7[%15, %c0_18], %14 {strides = array<i32>} : memref<32x128xf32, #tpu.memory_space<vmem>>, vector<1x128xf32>,
    }
    %c32_i32_5 = arith.constant 32 : i32
    %c0_i32_6 = arith.constant 0 : i32
    %c32_i32_7 = arith.constant 32 : i32
    %3 = arith.addi %c0_i32_6, %c32_i32_7 : i32
    %c1_i32_8 = arith.constant 1 : i32
    scf.for %arg9 = %c0_i32_6 to %3 step %c1_i32_8  : i32 {
      %c1_i32_15 = arith.constant 1 : i32
      %8 = arith.muli %arg9, %c1_i32_15 : i32
      %c0_i32_16 = arith.constant 0 : i32
      %9 = arith.addi %c0_i32_16, %8 : i32
      %10 = arith.addi %0, %9 : i32
      %11 = arith.index_cast %10 : i32 to index
      %12 = memref.load %arg1[%11] : memref<32xi32, #tpu.memory_space<smem>>
      %c0_i32_17 = arith.constant 0 : i32
      %c0_i32_18 = arith.constant 0 : i32
      %13 = tpu.memref_slice %arg3[%12, %c0_i32_18] : memref<256x128xf32, #tpu.memory_space<any>> -> memref<1x128xf32, #tpu.memory_space<any>>
      %c0_i32_19 = arith.constant 0 : i32
      %14 = tpu.memref_slice %arg6[%9, %c0_i32_19] : memref<32x128xf32, #tpu.memory_space<vmem>> -> memref<1x128xf32, #tpu.memory_space<vmem>>
      %15 = tpu.memref_slice %arg8[%c0_i32_17] : memref<1x!tpu.dma_semaphore, #tpu.memory_space<semaphore_mem>> -> memref<1x!tpu.dma_semaphore, #tpu.memory_space<semaphore_mem>>
      %16 = tpu.memref_squeeze %15 : memref<1x!tpu.dma_semaphore, #tpu.memory_space<semaphore_mem>> -> memref<!tpu.dma_semaphore, #tpu.memory_space<semaphore_mem>>
      tpu.wait_dma2 semaphore(%16 : memref<!tpu.dma_semaphore, #tpu.memory_space<semaphore_mem>>) src(%13 : memref<1x128xf32, #tpu.memory_space<any>>) dst(%14 : memref<1x128xf32, #tpu.memory_space<vmem>>)
    }
    %c32_i32_9 = arith.constant 32 : i32
    %c0 = arith.constant 0 : index
    %c0_10 = arith.constant 0 : index
    %4 = vector.load %arg6[%c0, %c0_10] : memref<32x128xf32, #tpu.memory_space<vmem>>, vector<32x128xf32>
    %c0_11 = arith.constant 0 : index
    %c0_12 = arith.constant 0 : index
    %5 = vector.load %arg7[%c0_11, %c0_12] : memref<32x128xf32, #tpu.memory_space<vmem>>, vector<32x128xf32>
    %6 = arith.addf %4, %5 : vector<32x128xf32>
    %c0_13 = arith.constant 0 : index
    %c0_14 = arith.constant 0 : index
    %7 = vector.load %arg5[%c0_13, %c0_14] : memref<32x128xf32, #tpu.memory_space<vmem>>, vector<32x128xf32>
    tpu.vector_store %arg5[%c0_13, %c0_14], %6 {strides = array<i32>} : memref<32x128xf32, #tpu.memory_space<vmem>>, vector<32x128xf32>,
    return
  }
  func.func @transform_1(%arg0: i32, %arg1: memref<32xi32, #tpu.memory_space<smem>>, %arg2: memref<32xi32, #tpu.memory_space<smem>>) -> (i32, i32) {
    %c0_i32 = arith.constant 0 : i32
    %c0_i32_0 = arith.constant 0 : i32
    %c0_i32_1 = arith.constant 0 : i32
    return %c0_i32, %c0_i32_0 : i32, i32
  }
  func.func @transform_2(%arg0: i32, %arg1: memref<32xi32, #tpu.memory_space<smem>>, %arg2: memref<32xi32, #tpu.memory_space<smem>>) -> (i32, i32) {
    %c0_i32 = arith.constant 0 : i32
    %c0_i32_0 = arith.constant 0 : i32
    return %arg0, %c0_i32 : i32, i32
  }
}

</mosaic_0001>

<llo_original>
// kernel: _lambda_.1
$region0: #{_lambda_.1}
  #allocation0 [shape = 'u32[]', space=smem, size = 0x4, offset = 0x4, fixed_abs, tag = 'smem constant byte address 0x4 - core index']
  #allocation1 [shape = 'u32[144,128]{1,0:T(1,128)}', space=vmem, size = 0x12000, scoped, tag = 'internal scratch']
  #allocation2 [shape = 'f32[32,128]{1,0:T(8,128)}', space=vmem, size = 0x4000, scoped, tag = 'scratch operand']
  #allocation3 [shape = 'f32[32,128]{1,0:T(8,128)}', space=vmem, size = 0x4000, scoped, tag = 'scratch operand']
  #allocation4 [shape = 's32[1]{0}', space=sflag, size = 0x4, scoped, tag = 'scratch operand']
  #allocation5 [shape = 's32[1]{0}', space=sflag, size = 0x4, scoped, tag = 'scoped memory for _lambda_.1']
  #allocation6 [shape = 'u8[512]{0}', space=smem, size = 0x200, scoped, tag = 'prefetched SMEM operand 0']
  #allocation7 [shape = 'u8[512]{0}', space=smem, size = 0x200, scoped, tag = 'prefetched SMEM operand 1']
  #allocation12 [shape = 's32[]', space=sflag, size = 0x4, offset = 0, fixed_abs, tag = 'sflag constant byte address 0x0 - dummy sync flag']
  #allocation13 [shape = 's32[]', space=sflag, size = 0x4, offset = 0, fixed_abs, tag = 'sflag constant byte address 0x0 - dummy sync flag']
  #allocation14 [shape = 'u32[]', space=smem, size = 0x4, offset = 0x44, fixed_abs, tag = 'smem constant byte address 0x44 - assertion arg 0']
  #allocation15 [shape = 'u32[]', space=smem, size = 0x4, offset = 0x48, fixed_abs, tag = 'smem constant byte address 0x48 - assertion arg 1']
  %s0 = inlined_call_operand.hbm [shape: s32[32], index: 0, kind: input, shape index: {}]
  %s1 = inlined_call_operand.hbm [shape: s32[32], index: 1, kind: input, shape index: {}]
  %s2 = inlined_call_operand.hbm [shape: f32[256,128], index: 2, kind: input, shape index: {}]
  %s3 = inlined_call_operand.hbm [shape: f32[64,128], index: 3, kind: input, shape index: {}]
  %s4 = inlined_call_operand.hbm [shape: f32[32,128], index: 4, kind: output, shape index: {}]
  %s5 = sld [smem:[#allocation0]]
  $region43: #{_lambda_.1} parent=0
    _
  %s7 = ssub.s32 1, %s5
  %s8 = scalar_select 0, %s7, %s5
  %10 = dma.hbm_to_smem %s0, 16, [#allocation6], [#allocation5]
  %12 = dma.hbm_to_smem %s1, 16, [#allocation7], [#allocation5]
  %13 = dma.done [#allocation5], 32
  %14 = sfence
  $region1: #{_lambda_.1} parent=0
    #allocation8 [shape = 'u8[32768]{0}', space=vmem, size = 0x8000, scoped, tag = 'input window, operand 3, single buffered']
    #allocation9 [shape = 's32[1]{0}', space=sflag, size = 0x4, scoped, tag = 'scoped memory for _lambda_.1']
    #allocation10 [shape = 's32[1]{0}', space=sflag, size = 0x4, scoped, tag = 'scoped memory for _lambda_.1']
    #allocation11 [shape = 'u8[16384]{0}', space=vmem, size = 0x4000, scoped, tag = 'output window, operand 0, single buffered']
    %15 = vsyncpa [#allocation9], 0
    %16 = vsyncpa [#allocation10], 0
    // Predicated region
    $region2: #{_lambda_.1} parent=1 // pred_check
      _
    $region3: #{_lambda_.1} parent=1 // pred_check_branch
      %18 = sbr.rel (0) target = $region5
    $region4: #{_lambda_.1} parent=1 // pred_region
      %s20 = ssub.s32 1024, 1024
      %21 = vsyncadd [#allocation9], %s20
      %s22 = sshll.u32 [#allocation8], 4
      %s23 = int_to_ptr.vmem [resolvable:$true] %s22
      %28 = dma.hbm_to_vmem [thread:$0]  %s3, 1024, %s23, [#allocation9], 128, 128, 8
    $region5: #{_lambda_.1} parent=1 // pred_fallthru
      _
    // Predicated region
    $region6: #{_lambda_.1} parent=1 // pred_check
      _
    $region7: #{_lambda_.1} parent=1 // pred_check_branch
      %30 = sbr.rel (0) target = $region9
    $region8: #{_lambda_.1} parent=1 // pred_region
      %31 = dma.done [#allocation9], 1024
    $region9: #{_lambda_.1} parent=1 // pred_fallthru
      _
    %s32 = smul.u32 0, 32
    loop: start=0, step=1, limit=32
    $region10: #{_lambda_.1} parent=1 // loop_pre_header
      _
    $region11: #{_lambda_.1} parent=1 // loop_header
      %s34 = sphi 0, %s38
      %p35 = scmp.ge.s32.totalorder %s34, 32
    $region12: #{_lambda_.1} parent=1 // loop_header_branch
      %37 = sbr.rel (%p35) target = $region16
    $region13: #{_lambda_.1} parent=1 // loop_body
      %s39 = sadd.s32 %s32, %s34
      %s40 = sld [smem:[#allocation6 + %s39]]
      %s41 = smul.addr %s40, 16
      %s42 = scalar_lea.hbm %s2, %s41
      %s43 = scalar_lea.vmem [#allocation2], %s34
      // Predicated region
      $region17: #{_lambda_.1} parent=13 // pred_check
        _
      $region18: #{_lambda_.1} parent=13 // pred_check_branch
        %45 = sbr.rel target = $region20
      $region19: #{_lambda_.1} parent=13 // pred_region
        %46 = sst [smem:[#allocation14]] [#allocation13]
        %47 = sst [smem:[#allocation15]] [#allocation12]
      $region20: #{_lambda_.1} parent=13 // pred_fallthru
        _
      %49 = shalt.err (0)
      %s51 = sshll.u32 %s43, 4
      %s52 = int_to_ptr.vmem [resolvable:$true] %s51
      %54 = dma.hbm_to_vmem [thread:$0]  %s42, 16, %s52, [#allocation4]
    $region14: #{_lambda_.1} parent=1 // loop_footer
      %s38 = sadd.s32 1, %s34
    $region15: #{_lambda_.1} parent=1 // loop_footer_branch
      %33 = sbr.rel target = $region11
    $region16: #{_lambda_.1} parent=1 // loop_exit
      _
    loop: start=0, step=1, limit=32
    $region21: #{_lambda_.1} parent=1 // loop_pre_header
      _
    $region22: #{_lambda_.1} parent=1 // loop_header
      %s56 = sphi 0, %s60
      %p57 = scmp.ge.s32.totalorder %s56, 32
    $region23: #{_lambda_.1} parent=1 // loop_header_branch
      %59 = sbr.rel (%p57) target = $region27
    $region24: #{_lambda_.1} parent=1 // loop_body
      %s61 = sadd.s32 %s32, %s56
      %s62 = sld [smem:[#allocation7 + %s61]]
      %s63 = scalar_lea.vmem [#allocation8], %s62
      %v64 = vld [vmem:[%s63] sm:$0x1]
      %s65 = scalar_lea.vmem [#allocation3], %s56
      %66 = vst [vmem:[%s65] sm:$0x1] %v64
    $region25: #{_lambda_.1} parent=1 // loop_footer
      %s60 = sadd.s32 1, %s56
    $region26: #{_lambda_.1} parent=1 // loop_footer_branch
      %55 = sbr.rel target = $region22
    $region27: #{_lambda_.1} parent=1 // loop_exit
      _
    loop: start=0, step=1, limit=32
    $region28: #{_lambda_.1} parent=1 // loop_pre_header
      _
    $region29: #{_lambda_.1} parent=1 // loop_header
      %s68 = sphi 0, %s72
      %p69 = scmp.ge.s32.totalorder %s68, 32
    $region30: #{_lambda_.1} parent=1 // loop_header_branch
      %71 = sbr.rel (%p69) target = $region34
    $region31: #{_lambda_.1} parent=1 // loop_body
      %s73 = sadd.s32 %s32, %s68
      %s74 = sld [smem:[#allocation6 + %s73]]
      %s75 = smul.u32 1, 1
      %s76 = sshll.u32 %s75, 4
      %77 = dma.done [#allocation4], %s76
    $region32: #{_lambda_.1} parent=1 // loop_footer
      %s72 = sadd.s32 1, %s68
    $region33: #{_lambda_.1} parent=1 // loop_footer_branch
      %67 = sbr.rel target = $region29
    $region34: #{_lambda_.1} parent=1 // loop_exit
      _
    %v78 = vld [vmem:[#allocation2] sm:$0xff]
    %v79 = vld [vmem:[#allocation2 + $0x8] sm:$0xff]
    %v80 = vld [vmem:[#allocation2 + $0x10] sm:$0xff]
    %v81 = vld [vmem:[#allocation2 + $0x18] sm:$0xff]
    %v82 = vld [vmem:[#allocation3] sm:$0xff]
    %v83 = vld [vmem:[#allocation3 + $0x8] sm:$0xff]
    %v84 = vld [vmem:[#allocation3 + $0x10] sm:$0xff]
    %v85 = vld [vmem:[#allocation3 + $0x18] sm:$0xff]
    %v86 = vadd.f32 %v78, %v82
    %v87 = vadd.f32 %v79, %v83
    %v88 = vadd.f32 %v80, %v84
    %v89 = vadd.f32 %v81, %v85
    %90 = vst [vmem:[#allocation11] sm:$0xff] %v86
    %91 = vst [vmem:[#allocation11 + $0x8] sm:$0xff] %v87
    %92 = vst [vmem:[#allocation11 + $0x10] sm:$0xff] %v88
    %93 = vst [vmem:[#allocation11 + $0x18] sm:$0xff] %v89
    // Predicated region
    $region35: #{_lambda_.1} parent=1 // pred_check
      _
    $region36: #{_lambda_.1} parent=1 // pred_check_branch
      %95 = sbr.rel (0) target = $region38
    $region37: #{_lambda_.1} parent=1 // pred_region
      %s97 = ssub.s32 512, 512
      %98 = vsyncadd [#allocation10], %s97
      %s99 = sshll.u32 [#allocation11], 4
      %s100 = int_to_ptr.vmem [resolvable:$true] %s99
      %105 = dma.vmem_to_hbm [thread:$0]  %s100, 512, %s4, [#allocation10], 128, 128, 8
    $region38: #{_lambda_.1} parent=1 // pred_fallthru
      _
    // Predicated region
    $region39: #{_lambda_.1} parent=1 // pred_check
      _
    $region40: #{_lambda_.1} parent=1 // pred_check_branch
      %107 = sbr.rel (0) target = $region42
    $region41: #{_lambda_.1} parent=1 // pred_region
      %108 = dma.done [#allocation10], 512
    $region42: #{_lambda_.1} parent=1 // pred_fallthru
      _
    %109 = vsyncpa [#allocation9], 1
    %110 = vsyncpa [#allocation10], 1
  %111 = vsyncmov [#allocation4]
  %s112 = vpop.sfrf %111
  %p113 = scmp.eq.s32.totalorder %s112, 0
  %p114 = pneg %p113
  %116 = shalt.err (%p114)

</llo_original>
